<compile_context>
chip_gen: v5e
topology: v5e:2x2
jax: 0.10.0
libtpu: 0.0.40
codegen_flags: <defaults>
</compile_context>

<pallas_src>
import math

import jax
import jax.numpy as jnp
from jax.experimental import pallas as pl
from jax.experimental.pallas import tpu as pltpu


def _round_up(x, m):
    return ((x + m - 1) // m) * m


def _minmaxpool_kernel(x_ref, mask_ref, w_ref, b_ref, out_ref):
    # x_ref:    (BB, N, F)      batch block
    # mask_ref: (BB, N, 1)      1.0 where padded, 0.0 otherwise
    # w_ref:    (2F, OUT_PAD)   linear weight, (in, out) layout, zero-padded cols
    # b_ref:    (1, OUT_PAD)    linear bias, zero-padded
    # out_ref:  (BB, OUT_PAD)
    x = x_ref[...]                                        # (BB, N, F)
    f = x.shape[-1]

    # Hoist the compare + broadcast: built once, reused for both selects.
    padded = jnp.broadcast_to(mask_ref[...] > 0.5, x.shape)

    x_for_max = jnp.where(padded, jnp.float32(-jnp.inf), x)
    x_for_min = jnp.where(padded, jnp.float32(jnp.inf), x)

    max_x = jnp.max(x_for_max, axis=1)                    # (BB, F)
    min_x = jnp.min(x_for_min, axis=1)                    # (BB, F)

    # concat([min_x, max_x], -1) @ W == min_x @ W[:F] + max_x @ W[F:]
    # (two-dot split avoids an in-kernel lane concat; M = BB feeds the MXU.)
    acc = jnp.dot(min_x, w_ref[:f, :], preferred_element_type=jnp.float32)
    acc = acc + jnp.dot(max_x, w_ref[f:, :], preferred_element_type=jnp.float32)
    out_ref[...] = acc + b_ref[...]


def _choose_block_b(B, N, F, out_pad, vmem_budget_bytes=24 << 20):
    """Batch rows per grid step: as many as a conservative VMEM budget allows
    (double-buffered x/mask/out blocks; budget sized for v7x's 64 MiB VMEM),
    multiple of 8, capped at 512, and leaving >= 2 grid steps when B is big
    enough so the batch axis can shard across v7x's two TensorCores."""
    bytes_per_row = 2 * 4 * (N * F + N + out_pad)         # 2 pipeline bufs, f32
    bb = int(vmem_budget_bytes // max(bytes_per_row, 1))
    bb = max(8, min(bb, 512))
    bb = (bb // 8) * 8
    b_ceil = _round_up(B, 8)
    bb = min(bb, b_ceil)
    if b_ceil >= 16:                                      # keep >= 2 grid steps
        bb = min(bb, max(8, (b_ceil // 2 // 8) * 8))
    return bb


def minmax_pool(x, mask, weight, bias, *, block_b=None):
    """
    x:      (B, N, F) float32
    mask:   (B, N, 1) float32 (1.0 = padded)
    weight: (2F, OUT) float32
    bias:   (OUT,)    float32
    returns (B, OUT)  float32
    """
    B, N, F = x.shape
    OUT = weight.shape[1]

    # Lane-dense output: zero-pad OUT to a multiple of 128; sliced off below.
    out_pad = _round_up(OUT, 128)
    if out_pad != OUT:
        weight = jnp.pad(weight, ((0, 0), (0, out_pad - OUT)))
        bias = jnp.pad(bias, (0, out_pad - OUT))
    bias2d = bias.reshape(1, out_pad)

    bb = block_b if block_b is not None else _choose_block_b(B, N, F, out_pad)
    b_pad = _round_up(B, bb)
    if b_pad != B:
        # Pad with UNMASKED zero rows so min/max stay finite; rows sliced off.
        x = jnp.pad(x, ((0, b_pad - B), (0, 0), (0, 0)))
        mask = jnp.pad(mask, ((0, b_pad - B), (0, 0), (0, 0)))

    num_steps = b_pad // bb

    # Explicit VMEM limit: double-buffered x/mask/out blocks + weight/bias,
    # with headroom, clamped so it stays safe on v5e's/v7x's smaller budgets.
    vmem_needed = (2 * 4 * bb * (N * F + N + out_pad)
                   + 2 * 4 * (2 * F * out_pad + out_pad))
    vmem_limit = int(min(max(2 * vmem_needed + (4 << 20), 16 << 20), 48 << 20))

    out = pl.pallas_call(
        _minmaxpool_kernel,
        out_shape=jax.ShapeDtypeStruct((b_pad, out_pad), jnp.float32),
        grid_spec=pltpu.PrefetchScalarGridSpec(
            num_scalar_prefetch=0,
            grid=(num_steps,),
            in_specs=[
                pl.BlockSpec((bb, N, F), lambda i: (i, 0, 0)),
                pl.BlockSpec((bb, N, 1), lambda i: (i, 0, 0)),
                pl.BlockSpec((2 * F, out_pad), lambda i: (0, 0)),
                pl.BlockSpec((1, out_pad), lambda i: (0, 0)),
            ],
            out_specs=pl.BlockSpec((bb, out_pad), lambda i: (i, 0)),
        ),
        compiler_params=pltpu.CompilerParams(
            dimension_semantics=("parallel",),
            vmem_limit_bytes=vmem_limit,
        ),
    )(x, mask, weight, bias2d)

    return out[:B, :OUT]


def xavier_uniform(key, fan_in, fan_out):
    # torch.nn.init.xavier_uniform_ on a (fan_out, fan_in) weight; we build the
    # transposed (fan_in, fan_out) matrix directly — same distribution.
    bound = math.sqrt(6.0 / (fan_in + fan_out))
    return jax.random.uniform(
        key, (fan_in, fan_out), jnp.float32, minval=-bound, maxval=bound)


if __name__ == "__main__":
    B, N_TILES, IN_FEATURES, OUT_FEATURES = 2, 8, 16, 4

    key = jax.random.PRNGKey(0)
    kx, kmask, kw = jax.random.split(key, 3)

    x = jax.random.normal(kx, (B, N_TILES, IN_FEATURES), jnp.float32)
    # mask: True (1.0) for padded tiles; keep at least one valid tile per row.
    mask_bool = jax.random.bernoulli(kmask, 0.3, (B, N_TILES, 1))
    mask_bool = mask_bool.at[:, 0, :].set(False)
    mask = mask_bool.astype(jnp.float32)

    # MLP(hidden=None) == single Linear(2*IN_FEATURES -> OUT_FEATURES),
    # xavier_uniform weight, zero bias, no final activation (returns logits).
    weight = xavier_uniform(kw, 2 * IN_FEATURES, OUT_FEATURES)
    bias = jnp.zeros((OUT_FEATURES,), jnp.float32)

    logits = minmax_pool(x, mask, weight, bias)
    jax.block_until_ready(logits)

    # Pure-JAX reference check of the forward pass.
    neg = jnp.where(mask_bool, -jnp.inf, x)
    pos = jnp.where(mask_bool, jnp.inf, x)
    agg = jnp.concatenate([jnp.min(pos, axis=1), jnp.max(neg, axis=1)], axis=1)
    ref = agg @ weight + bias
    assert logits.shape == (B, OUT_FEATURES)
    assert jnp.allclose(logits, ref, atol=1e-5, rtol=1e-5)

    print("KERNEL_OK")
</pallas_src>

<mosaic_0001>
module attributes {stable_mosaic.version = 11 : i64} {
  func.func @_minmaxpool_kernel(%arg0: i32, %arg1: memref<8x8x16xf32, #tpu.memory_space<vmem>>, %arg2: memref<8x8x1xf32, #tpu.memory_space<vmem>>, %arg3: memref<32x128xf32, #tpu.memory_space<vmem>>, %arg4: memref<1x128xf32, #tpu.memory_space<vmem>>, %arg5: memref<8x128xf32, #tpu.memory_space<vmem>>) attributes {dimension_semantics = [#tpu.dimension_semantics<parallel>], iteration_bounds = array<i64: 1>, scalar_prefetch = 0 : i64, scratch_operands = 0 : i64, tpu.core_type = #tpu.core_type<tc>, window_params = [{transform_indices = @transform_0, window_bounds = array<i64: 8, 8, 16>}, {transform_indices = @transform_1, window_bounds = array<i64: 8, 8, 1>}, {pipeline_mode = #tpu.pipeline_mode<synchronous>, transform_indices = @transform_2, window_bounds = array<i64: 32, 128>}, {pipeline_mode = #tpu.pipeline_mode<synchronous>, transform_indices = @transform_3, window_bounds = array<i64: 1, 128>}, {transform_indices = @transform_4, window_bounds = array<i64: 8, 128>}]} {
    %c0 = arith.constant 0 : index
    %c0_0 = arith.constant 0 : index
    %c0_1 = arith.constant 0 : index
    %0 = vector.load %arg1[%c0, %c0_0, %c0_1] : memref<8x8x16xf32, #tpu.memory_space<vmem>>, vector<8x8x16xf32>
    %c0_2 = arith.constant 0 : index
    %c0_3 = arith.constant 0 : index
    %c0_4 = arith.constant 0 : index
    %1 = vector.load %arg2[%c0_2, %c0_3, %c0_4] : memref<8x8x1xf32, #tpu.memory_space<vmem>>, vector<8x8x1xf32>
    %cst = arith.constant 5.000000e-01 : f32
    %2 = vector.broadcast %cst : f32 to vector<8x8x1xf32>
    %3 = arith.cmpf ogt, %1, %2 : vector<8x8x1xf32>
    %4 = vector.shape_cast %3 : vector<8x8x1xi1> to vector<8x8x1xi1>
    %5 = vector.broadcast %4 : vector<8x8x1xi1> to vector<8x8x16xi1>
    %cst_5 = arith.constant 0xFF800000 : f32
    %6 = vector.broadcast %cst_5 : f32 to vector<8x8x16xf32>
    %7 = arith.select %5, %6, %0 : vector<8x8x16xi1>, vector<8x8x16xf32>
    %cst_6 = arith.constant 0x7F800000 : f32
    %8 = vector.broadcast %cst_6 : f32 to vector<8x8x16xf32>
    %9 = arith.select %5, %8, %0 : vector<8x8x16xi1>, vector<8x8x16xf32>
    %cst_7 = arith.constant dense<0xFF800000> : vector<8x16xf32>
    %10 = vector.multi_reduction <maximumf>, %7, %cst_7 [1] : vector<8x8x16xf32> to vector<8x16xf32>
    %cst_8 = arith.constant dense<0x7F800000> : vector<8x16xf32>
    %11 = vector.multi_reduction <minimumf>, %9, %cst_8 [1] : vector<8x8x16xf32> to vector<8x16xf32>
    %c0_9 = arith.constant 0 : index
    %c0_10 = arith.constant 0 : index
    %12 = vector.load %arg3[%c0_9, %c0_10] : memref<32x128xf32, #tpu.memory_space<vmem>>, vector<16x128xf32>
    %cst_11 = arith.constant dense<0.000000e+00> : vector<8x128xf32>
    %13 = tpu.matmul %11, %12, %cst_11 {dimension_numbers = #tpu.dot_dimension_numbers<[1], [0], [0], [1], [0, 0, 1, 1], [], []>} : vector<8x16xf32>, vector<16x128xf32>, vector<8x128xf32> -> vector<8x128xf32>
    %c16 = arith.constant 16 : index
    %c0_12 = arith.constant 0 : index
    %14 = vector.load %arg3[%c16, %c0_12] : memref<32x128xf32, #tpu.memory_space<vmem>>, vector<16x128xf32>
    %cst_13 = arith.constant dense<0.000000e+00> : vector<8x128xf32>
    %15 = tpu.matmul %10, %14, %cst_13 {dimension_numbers = #tpu.dot_dimension_numbers<[1], [0], [0], [1], [0, 0, 1, 1], [], []>} : vector<8x16xf32>, vector<16x128xf32>, vector<8x128xf32> -> vector<8x128xf32>
    %16 = arith.addf %13, %15 : vector<8x128xf32>
    %c0_14 = arith.constant 0 : index
    %c0_15 = arith.constant 0 : index
    %17 = vector.load %arg4[%c0_14, %c0_15] : memref<1x128xf32, #tpu.memory_space<vmem>>, vector<1x128xf32>
    %18 = vector.broadcast %17 : vector<1x128xf32> to vector<8x128xf32>
    %19 = arith.addf %16, %18 : vector<8x128xf32>
    %c0_16 = arith.constant 0 : index
    %c0_17 = arith.constant 0 : index
    %20 = vector.load %arg5[%c0_16, %c0_17] : memref<8x128xf32, #tpu.memory_space<vmem>>, vector<8x128xf32>
    tpu.vector_store %arg5[%c0_16, %c0_17], %19 {strides = array<i32>} : memref<8x128xf32, #tpu.memory_space<vmem>>, vector<8x128xf32>,
    return
  }
  func.func @transform_0(%arg0: i32) -> (i32, i32, i32) {
    %c0_i32 = arith.constant 0 : i32
    %c0_i32_0 = arith.constant 0 : i32
    %c0_i32_1 = arith.constant 0 : i32
    return %arg0, %c0_i32, %c0_i32_0 : i32, i32, i32
  }
  func.func @transform_1(%arg0: i32) -> (i32, i32, i32) {
    %c0_i32 = arith.constant 0 : i32
    %c0_i32_0 = arith.constant 0 : i32
    %c0_i32_1 = arith.constant 0 : i32
    return %arg0, %c0_i32, %c0_i32_0 : i32, i32, i32
  }
  func.func @transform_2(%arg0: i32) -> (i32, i32) {
    %c0_i32 = arith.constant 0 : i32
    %c0_i32_0 = arith.constant 0 : i32
    %c0_i32_1 = arith.constant 0 : i32
    return %c0_i32, %c0_i32_0 : i32, i32
  }
  func.func @transform_3(%arg0: i32) -> (i32, i32) {
    %c0_i32 = arith.constant 0 : i32
    %c0_i32_0 = arith.constant 0 : i32
    %c0_i32_1 = arith.constant 0 : i32
    return %c0_i32, %c0_i32_0 : i32, i32
  }
  func.func @transform_4(%arg0: i32) -> (i32, i32) {
    %c0_i32 = arith.constant 0 : i32
    %c0_i32_0 = arith.constant 0 : i32
    return %arg0, %c0_i32 : i32, i32
  }
}

</mosaic_0001>

<llo_original>
// kernel: tpu_custom_call.1
$region0: #{tpu_custom_call.1}
  #allocation0 [shape = 'u32[]', space=smem, size = 0x4, offset = 0x4, fixed_abs, tag = 'smem constant byte address 0x4 - core index']
  #allocation1 [shape = 'u32[72,128]{1,0:T(1,128)}', space=vmem, size = 0x9000, scoped, tag = 'internal scratch']
  %s0 = inlined_call_operand.vmem [shape: f32[8,8,16], index: 0, kind: input, shape index: {}]
  %s1 = inlined_call_operand.vmem [shape: f32[8,8,1], index: 1, kind: input, shape index: {}]
  %s2 = inlined_call_operand.hbm [shape: f32[32,128], index: 2, kind: input, shape index: {}]
  %s3 = inlined_call_operand.vmem [shape: f32[1,128], index: 3, kind: input, shape index: {}]
  %s4 = inlined_call_operand.hbm [shape: f32[8,128], index: 4, kind: output, shape index: {}]
  %s5 = sld [smem:[#allocation0]]
  $region30: #{tpu_custom_call.1} parent=0
    _
  %s7 = ssub.s32 1, %s5
  %s8 = scalar_select 0, %s7, %s5
  $region1: #{tpu_custom_call.1} parent=0
    #allocation2 [shape = 'u8[16384]{0}', space=vmem, size = 0x4000, scoped, tag = 'input window, operand 2, single buffered']
    #allocation3 [shape = 's32[1]{0}', space=sflag, size = 0x4, scoped, tag = 'scoped memory for tpu_custom_call.1']
    #allocation4 [shape = 's32[1]{0}', space=sflag, size = 0x4, scoped, tag = 'scoped memory for tpu_custom_call.1']
    #allocation5 [shape = 'u8[4096]{0}', space=vmem, size = 0x1000, scoped, tag = 'output window, operand 0, single buffered']
    %9 = vsyncpa [#allocation3], 0
    %10 = vsyncpa [#allocation4], 0
    // Predicated region
    $region2: #{tpu_custom_call.1} parent=1 // pred_check
      _
    $region3: #{tpu_custom_call.1} parent=1 // pred_check_branch
      %12 = sbr.rel (0) target = $region5
    $region4: #{tpu_custom_call.1} parent=1 // pred_region
      _
    $region5: #{tpu_custom_call.1} parent=1 // pred_fallthru
      _
    // Predicated region
    $region6: #{tpu_custom_call.1} parent=1 // pred_check
      _
    $region7: #{tpu_custom_call.1} parent=1 // pred_check_branch
      %14 = sbr.rel (0) target = $region9
    $region8: #{tpu_custom_call.1} parent=1 // pred_region
      _
    $region9: #{tpu_custom_call.1} parent=1 // pred_fallthru
      _
    // Predicated region
    $region10: #{tpu_custom_call.1} parent=1 // pred_check
      _
    $region11: #{tpu_custom_call.1} parent=1 // pred_check_branch
      %16 = sbr.rel (0) target = $region13
    $region12: #{tpu_custom_call.1} parent=1 // pred_region
      %18 = vsyncadd [#allocation3], 0
      %s19 = sshll.u32 %s2, 4
      %s20 = int_to_ptr.hbm [resolvable:$true] %s19
      %s21 = sshll.u32 [#allocation2], 4
      %s22 = int_to_ptr.vmem [resolvable:$true] %s21
      %27 = dma.hbm_to_vmem [thread:$0]  %s20, 512, %s22, [#allocation3], 128, 128, 8
    $region13: #{tpu_custom_call.1} parent=1 // pred_fallthru
      _
    // Predicated region
    $region14: #{tpu_custom_call.1} parent=1 // pred_check
      _
    $region15: #{tpu_custom_call.1} parent=1 // pred_check_branch
      %29 = sbr.rel (0) target = $region17
    $region16: #{tpu_custom_call.1} parent=1 // pred_region
      _
    $region17: #{tpu_custom_call.1} parent=1 // pred_fallthru
      _
    // Predicated region
    $region18: #{tpu_custom_call.1} parent=1 // pred_check
      _
    $region19: #{tpu_custom_call.1} parent=1 // pred_check_branch
      %31 = sbr.rel (0) target = $region21
    $region20: #{tpu_custom_call.1} parent=1 // pred_region
      %33 = dma.done [#allocation3], 512
    $region21: #{tpu_custom_call.1} parent=1 // pred_fallthru
      _
    %v34 = vld [vmem:[%s0] sm:$0xff]
    %v35 = vld [vmem:[%s0 + $0x8] sm:$0xff]
    %v36 = vld [vmem:[%s0 + $0x10] sm:$0xff]
    %v37 = vld [vmem:[%s0 + $0x18] sm:$0xff]
    %v38 = vld [vmem:[%s0 + $0x20] sm:$0xff]
    %v39 = vld [vmem:[%s0 + $0x28] sm:$0xff]
    %v40 = vld [vmem:[%s0 + $0x30] sm:$0xff]
    %v41 = vld [vmem:[%s0 + $0x38] sm:$0xff]
    %v42 = vld [vmem:[%s1] sm:$0xff]
    %v43 = vld [vmem:[%s1 + $0x8] sm:$0xff]
    %v44 = vld [vmem:[%s1 + $0x10] sm:$0xff]
    %v45 = vld [vmem:[%s1 + $0x18] sm:$0xff]
    %v46 = vld [vmem:[%s1 + $0x20] sm:$0xff]
    %v47 = vld [vmem:[%s1 + $0x28] sm:$0xff]
    %v48 = vld [vmem:[%s1 + $0x30] sm:$0xff]
    %v49 = vld [vmem:[%s1 + $0x38] sm:$0xff]
    %vm50 = vcmp.gt.f32.partialorder %v42, 0.5
    %vm51 = vcmp.gt.f32.partialorder %v43, 0.5
    %vm52 = vcmp.gt.f32.partialorder %v44, 0.5
    %vm53 = vcmp.gt.f32.partialorder %v45, 0.5
    %vm54 = vcmp.gt.f32.partialorder %v46, 0.5
    %vm55 = vcmp.gt.f32.partialorder %v47, 0.5
    %vm56 = vcmp.gt.f32.partialorder %v48, 0.5
    %vm57 = vcmp.gt.f32.partialorder %v49, 0.5
    %v58 = vsel %vm50, 1, 0
    %v59 = vsel %vm51, 1, 0
    %v60 = vsel %vm52, 1, 0
    %v61 = vsel %vm53, 1, 0
    %v62 = vsel %vm54, 1, 0
    %v63 = vsel %vm55, 1, 0
    %v64 = vsel %vm56, 1, 0
    %v65 = vsel %vm57, 1, 0
    %66 = vset.pattern.permute.xlu0 0
    %67 = vperm.xlu0 %66, %v58
    %v68 = vpop.permute.xlu0 %67
    %69 = vset.pattern.permute.xlu0 0
    %70 = vperm.xlu0 %69, %v59
    %v71 = vpop.permute.xlu0 %70
    %72 = vset.pattern.permute.xlu0 0
    %73 = vperm.xlu0 %72, %v60
    %v74 = vpop.permute.xlu0 %73
    %75 = vset.pattern.permute.xlu0 0
    %76 = vperm.xlu0 %75, %v61
    %v77 = vpop.permute.xlu0 %76
    %78 = vset.pattern.permute.xlu0 0
    %79 = vperm.xlu0 %78, %v62
    %v80 = vpop.permute.xlu0 %79
    %81 = vset.pattern.permute.xlu0 0
    %82 = vperm.xlu0 %81, %v63
    %v83 = vpop.permute.xlu0 %82
    %84 = vset.pattern.permute.xlu0 0
    %85 = vperm.xlu0 %84, %v64
    %v86 = vpop.permute.xlu0 %85
    %87 = vset.pattern.permute.xlu0 0
    %88 = vperm.xlu0 %87, %v65
    %v89 = vpop.permute.xlu0 %88
    %vm90 = vcmp.eq.s32.totalorder %v68, 1
    %vm91 = vcmp.eq.s32.totalorder %v71, 1
    %vm92 = vcmp.eq.s32.totalorder %v74, 1
    %vm93 = vcmp.eq.s32.totalorder %v77, 1
    %vm94 = vcmp.eq.s32.totalorder %v80, 1
    %vm95 = vcmp.eq.s32.totalorder %v83, 1
    %vm96 = vcmp.eq.s32.totalorder %v86, 1
    %vm97 = vcmp.eq.s32.totalorder %v89, 1
    %v98 = vsel %vm90, -inf, %v34
    %v99 = vsel %vm91, -inf, %v35
    %v100 = vsel %vm92, -inf, %v36
    %v101 = vsel %vm93, -inf, %v37
    %v102 = vsel %vm94, -inf, %v38
    %v103 = vsel %vm95, -inf, %v39
    %v104 = vsel %vm96, -inf, %v40
    %v105 = vsel %vm97, -inf, %v41
    %v106 = vsel %vm90, inf, %v34
    %v107 = vsel %vm91, inf, %v35
    %v108 = vsel %vm92, inf, %v36
    %v109 = vsel %vm93, inf, %v37
    %v110 = vsel %vm94, inf, %v38
    %v111 = vsel %vm95, inf, %v39
    %v112 = vsel %vm96, inf, %v40
    %v113 = vsel %vm97, inf, %v41
    %vm114 = vcmask 130048
    %v115 = vsel %vm114, %v98, -inf
    %v116 = vrot.slane %v115, 4
    %v117 = vmax.f32 %v115, %v116
    %v118 = vrot.slane %v117, 2
    %v119 = vmax.f32 %v117, %v118
    %v120 = vrot.slane %v119, 1
    %v121 = vmax.f32 %v119, %v120
    %v122 = vsel %vm114, %v99, -inf
    %v123 = vrot.slane %v122, 4
    %v124 = vmax.f32 %v122, %v123
    %v125 = vrot.slane %v124, 2
    %v126 = vmax.f32 %v124, %v125
    %v127 = vrot.slane %v126, 1
    %v128 = vmax.f32 %v126, %v127
    %v129 = vsel %vm114, %v100, -inf
    %v130 = vrot.slane %v129, 4
    %v131 = vmax.f32 %v129, %v130
    %v132 = vrot.slane %v131, 2
    %v133 = vmax.f32 %v131, %v132
    %v134 = vrot.slane %v133, 1
    %v135 = vmax.f32 %v133, %v134
    %v136 = vsel %vm114, %v101, -inf
    %v137 = vrot.slane %v136, 4
    %v138 = vmax.f32 %v136, %v137
    %v139 = vrot.slane %v138, 2
    %v140 = vmax.f32 %v138, %v139
    %v141 = vrot.slane %v140, 1
    %v142 = vmax.f32 %v140, %v141
    %v143 = vsel %vm114, %v102, -inf
    %v144 = vrot.slane %v143, 4
    %v145 = vmax.f32 %v143, %v144
    %v146 = vrot.slane %v145, 2
    %v147 = vmax.f32 %v145, %v146
    %v148 = vrot.slane %v147, 1
    %v149 = vmax.f32 %v147, %v148
    %v150 = vsel %vm114, %v103, -inf
    %v151 = vrot.slane %v150, 4
    %v152 = vmax.f32 %v150, %v151
    %v153 = vrot.slane %v152, 2
    %v154 = vmax.f32 %v152, %v153
    %v155 = vrot.slane %v154, 1
    %v156 = vmax.f32 %v154, %v155
    %v157 = vsel %vm114, %v104, -inf
    %v158 = vrot.slane %v157, 4
    %v159 = vmax.f32 %v157, %v158
    %v160 = vrot.slane %v159, 2
    %v161 = vmax.f32 %v159, %v160
    %v162 = vrot.slane %v161, 1
    %v163 = vmax.f32 %v161, %v162
    %v164 = vsel %vm114, %v105, -inf
    %v165 = vrot.slane %v164, 4
    %v166 = vmax.f32 %v164, %v165
    %v167 = vrot.slane %v166, 2
    %v168 = vmax.f32 %v166, %v167
    %v169 = vrot.slane %v168, 1
    %v170 = vmax.f32 %v168, %v169
    %v171 = vsel %vm114, %v106, inf
    %v172 = vrot.slane %v171, 4
    %v173 = vmin.f32 %v171, %v172
    %v174 = vrot.slane %v173, 2
    %v175 = vmin.f32 %v173, %v174
    %v176 = vrot.slane %v175, 1
    %v177 = vmin.f32 %v175, %v176
    %v178 = vsel %vm114, %v107, inf
    %v179 = vrot.slane %v178, 4
    %v180 = vmin.f32 %v178, %v179
    %v181 = vrot.slane %v180, 2
    %v182 = vmin.f32 %v180, %v181
    %v183 = vrot.slane %v182, 1
    %v184 = vmin.f32 %v182, %v183
    %v185 = vsel %vm114, %v108, inf
    %v186 = vrot.slane %v185, 4
    %v187 = vmin.f32 %v185, %v186
    %v188 = vrot.slane %v187, 2
    %v189 = vmin.f32 %v187, %v188
    %v190 = vrot.slane %v189, 1
    %v191 = vmin.f32 %v189, %v190
    %v192 = vsel %vm114, %v109, inf
    %v193 = vrot.slane %v192, 4
    %v194 = vmin.f32 %v192, %v193
    %v195 = vrot.slane %v194, 2
    %v196 = vmin.f32 %v194, %v195
    %v197 = vrot.slane %v196, 1
    %v198 = vmin.f32 %v196, %v197
    %v199 = vsel %vm114, %v110, inf
    %v200 = vrot.slane %v199, 4
    %v201 = vmin.f32 %v199, %v200
    %v202 = vrot.slane %v201, 2
    %v203 = vmin.f32 %v201, %v202
    %v204 = vrot.slane %v203, 1
    %v205 = vmin.f32 %v203, %v204
    %v206 = vsel %vm114, %v111, inf
    %v207 = vrot.slane %v206, 4
    %v208 = vmin.f32 %v206, %v207
    %v209 = vrot.slane %v208, 2
    %v210 = vmin.f32 %v208, %v209
    %v211 = vrot.slane %v210, 1
    %v212 = vmin.f32 %v210, %v211
    %v213 = vsel %vm114, %v112, inf
    %v214 = vrot.slane %v213, 4
    %v215 = vmin.f32 %v213, %v214
    %v216 = vrot.slane %v215, 2
    %v217 = vmin.f32 %v215, %v216
    %v218 = vrot.slane %v217, 1
    %v219 = vmin.f32 %v217, %v218
    %v220 = vsel %vm114, %v113, inf
    %v221 = vrot.slane %v220, 4
    %v222 = vmin.f32 %v220, %v221
    %v223 = vrot.slane %v222, 2
    %v224 = vmin.f32 %v222, %v223
    %v225 = vrot.slane %v224, 1
    %v226 = vmin.f32 %v224, %v225
    %v227 = vld [vmem:[#allocation2] sm:$0xff]
    %v228 = vld [vmem:[#allocation2 + $0x8] sm:$0xff]
    %v229 = vld [vmem:[#allocation2 + $0x10] sm:$0xff]
    %v230 = vld [vmem:[#allocation2 + $0x18] sm:$0xff]
    %vm239 = vcmask 1041409
    %v240 = vsel %vm239, %v128, %v121
    %vm241 = vcmask 1042434
    %v242 = vsel %vm241, %v135, %v240
    %vm243 = vcmask 1043459
    %v244 = vsel %vm243, %v142, %v242
    %vm245 = vcmask 1044484
    %v246 = vsel %vm245, %v149, %v244
    %vm247 = vcmask 1045509
    %v248 = vsel %vm247, %v156, %v246
    %vm249 = vcmask 1046534
    %v250 = vsel %vm249, %v163, %v248
    %vm251 = vcmask 1047559
    %v252 = vsel %vm251, %v170, %v250
    %v253 = vsel %vm114, %v252, 0
    %255 = vmatpush.msra.mxu0 0.0
    %256 = vmatpush.msra.mxu0 0.0
    %257 = vmatpush.msra.mxu0 0.0
    %258 = vmatpush.msra.mxu0 0.0
    %259 = vmatpush.msra.mxu0 0.0
    %260 = vmatpush.msra.mxu0 0.0
    %261 = vmatpush.msra.mxu0 0.0
    %262 = vmatpush.msra.mxu0 0.0
    %263 = vmatpush.msra.mxu0 0.0
    %264 = vmatpush.msra.mxu0 0.0
    %265 = vmatpush.msra.mxu0 0.0
    %266 = vmatpush.msra.mxu0 0.0
    %267 = vmatpush.msra.mxu0 0.0
    %268 = vmatpush.msra.mxu0 0.0
    %269 = vmatpush.msra.mxu0 %v230
    %270 = vmatpush.msra.mxu0 %v229
    %271 = vmatmul.f32.gmra.mxu0 %v253
    %v272 = vpop.f32.mrf.mxu0
    %v273 = vadd.f32 0.0, %v272
    %274 = vdwg.mxu0
    %v283 = vsel %vm239, %v184, %v177
    %v284 = vsel %vm241, %v191, %v283
    %v285 = vsel %vm243, %v198, %v284
    %v286 = vsel %vm245, %v205, %v285
    %v287 = vsel %vm247, %v212, %v286
    %v288 = vsel %vm249, %v219, %v287
    %v289 = vsel %vm251, %v226, %v288
    %v290 = vsel %vm114, %v289, 0
    %292 = vmatpush.msra.mxu0 0.0
    %293 = vmatpush.msra.mxu0 0.0
    %294 = vmatpush.msra.mxu0 0.0
    %295 = vmatpush.msra.mxu0 0.0
    %296 = vmatpush.msra.mxu0 0.0
    %297 = vmatpush.msra.mxu0 0.0
    %298 = vmatpush.msra.mxu0 0.0
    %299 = vmatpush.msra.mxu0 0.0
    %300 = vmatpush.msra.mxu0 0.0
    %301 = vmatpush.msra.mxu0 0.0
    %302 = vmatpush.msra.mxu0 0.0
    %303 = vmatpush.msra.mxu0 0.0
    %304 = vmatpush.msra.mxu0 0.0
    %305 = vmatpush.msra.mxu0 0.0
    %306 = vmatpush.msra.mxu0 %v228
    %307 = vmatpush.msra.mxu0 %v227
    %308 = vmatmul.f32.gmra.mxu0 %v290
    %v309 = vpop.f32.mrf.mxu0
    %v310 = vadd.f32 %v273, %v309
    %311 = vdwg.mxu0
    %v312 = vld [vmem:[%s3] sm:$0x1]
    %v314 = vperm.slane %v312, 0
    %v316 = vadd.f32 %v310, %v314
    %317 = vst [vmem:[#allocation5] sm:$0xff] %v316
    // Predicated region
    $region22: #{tpu_custom_call.1} parent=1 // pred_check
      _
    $region23: #{tpu_custom_call.1} parent=1 // pred_check_branch
      %319 = sbr.rel (0) target = $region25
    $region24: #{tpu_custom_call.1} parent=1 // pred_region
      %321 = vsyncadd [#allocation4], 0
      %s323 = sshll.u32 [#allocation5], 4
      %s324 = int_to_ptr.vmem [resolvable:$true] %s323
      %s325 = sshll.u32 %s4, 4
      %s326 = int_to_ptr.hbm [resolvable:$true] %s325
      %328 = dma.vmem_to_hbm [thread:$0]  %s324, 128, %s326, [#allocation4]
    $region25: #{tpu_custom_call.1} parent=1 // pred_fallthru
      _
    // Predicated region
    $region26: #{tpu_custom_call.1} parent=1 // pred_check
      _
    $region27: #{tpu_custom_call.1} parent=1 // pred_check_branch
      %330 = sbr.rel (0) target = $region29
    $region28: #{tpu_custom_call.1} parent=1 // pred_region
      %332 = dma.done [#allocation4], 128
    $region29: #{tpu_custom_call.1} parent=1 // pred_fallthru
      _
    %333 = vsyncpa [#allocation3], 1
    %334 = vsyncpa [#allocation4], 1

</llo_original>
